<compile_context>
chip_gen: v7x
topology: tpu7x:2x2x1
jax: 0.10.0
libtpu: 0.0.40
codegen_flags: <defaults>
</compile_context>

<pallas_src>
import functools

import jax
import jax.numpy as jnp
from jax.experimental import pallas as pl
from jax.experimental.pallas import tpu as pltpu

_LANES = 128          # lane-dense width for the value output
_ROW_TILE_MAX = 1024  # rows per grid step (few MB of VMEM even double-buffered; safe on v5e/v6e/v7x)


def _round_up(x, m):
    return ((x + m - 1) // m) * m


def _critic_kernel(obs_ref, act_ref, h_ref,
                   w1o_ref, w1a_ref, w1id_ref, b1_ref,
                   wih_ref, bih_ref, whh_ref, bhh_ref,
                   g_ref, bln_ref, w2_ref, b2_ref,
                   v_ref, hh_ref, *, n_agents, row_tile):
    H = h_ref.shape[-1]

    # ---- fc1 + ReLU, with the input concat fused in (obs | last_action | agent_id one-hot) ----
    x = jnp.dot(obs_ref[...], w1o_ref[...], preferred_element_type=jnp.float32)
    x = x + jnp.dot(act_ref[...], w1a_ref[...], preferred_element_type=jnp.float32)

    # agent-id one-hot built in-kernel: row r (global) belongs to agent r % n_agents.
    row0 = pl.program_id(0) * row_tile
    rows = row0 + jax.lax.broadcasted_iota(jnp.int32, (row_tile, n_agents), 0)
    cols = jax.lax.broadcasted_iota(jnp.int32, (row_tile, n_agents), 1)
    onehot = (jnp.remainder(rows, n_agents) == cols).astype(jnp.float32)
    x = x + jnp.dot(onehot, w1id_ref[...], preferred_element_type=jnp.float32)

    x = jnp.maximum(x + b1_ref[...], 0.0)

    # ---- GRUCell (PyTorch gate order: r, z, n) ----
    h = h_ref[...]
    gi = jnp.dot(x, wih_ref[...], preferred_element_type=jnp.float32) + bih_ref[...]
    gh = jnp.dot(h, whh_ref[...], preferred_element_type=jnp.float32) + bhh_ref[...]
    r = jax.nn.sigmoid(gi[:, 0:H] + gh[:, 0:H])
    z = jax.nn.sigmoid(gi[:, H:2 * H] + gh[:, H:2 * H])
    n = jnp.tanh(gi[:, 2 * H:3 * H] + r * gh[:, 2 * H:3 * H])
    hh = (1.0 - z) * n + z * h
    hh_ref[...] = hh

    # ---- LayerNorm over hidden dim (torch defaults: biased variance, eps=1e-5) ----
    mu = jnp.mean(hh, axis=-1, keepdims=True)
    var = jnp.mean(jnp.square(hh - mu), axis=-1, keepdims=True)
    xn = (hh - mu) * jax.lax.rsqrt(var + 1e-5)
    xn = xn * g_ref[...] + bln_ref[...]

    # ---- fc2 as VPU mul + lane reduction (no 1-wide MXU matmul) ----
    v = jnp.sum(xn * w2_ref[...], axis=-1, keepdims=True) + b2_ref[...]
    # lane-dense store: broadcast the per-row value across 128 lanes; wrapper slices [:, :1].
    v_ref[...] = jnp.broadcast_to(v, v_ref.shape)


def rnn_critic_pallas(obs_flat, act_flat, h_in, params, n_agents):
    """obs_flat: (N, Dobs), act_flat: (N, Dact), h_in: (N, H). Returns (v (N,1), hh (N,H))."""
    N, d_obs = obs_flat.shape
    d_act = act_flat.shape[-1]
    H = h_in.shape[-1]

    # Split fc1 weight by input source (obs | last_action | agent_id) once, outside the kernel.
    w1 = params['w1']
    w1_obs = w1[:d_obs]
    w1_act = w1[d_obs:d_obs + d_act]
    w1_aid = w1[d_obs + d_act:]
    w2_row = params['w2'].reshape(1, H)   # (H,1) -> (1,H) row for the VPU reduction

    # Row tiling: pad rows to a multiple of the tile so the last block never reads OOB.
    tn = min(_ROW_TILE_MAX, _round_up(N, 8))
    num_blocks = pl.cdiv(N, tn)
    n_pad = num_blocks * tn
    pad = n_pad - N
    if pad:
        obs_flat = jnp.pad(obs_flat, ((0, pad), (0, 0)))
        act_flat = jnp.pad(act_flat, ((0, pad), (0, 0)))
        h_in = jnp.pad(h_in, ((0, pad), (0, 0)))

    def row_spec(feat):
        return pl.BlockSpec((tn, feat), lambda i: (i, 0))

    def weight_spec(arr):
        return pl.BlockSpec(arr.shape, lambda i: (0, 0))   # resident in VMEM across the grid

    args = (obs_flat, act_flat, h_in,
            w1_obs, w1_act, w1_aid, params['b1'],
            params['w_ih'], params['b_ih'],
            params['w_hh'], params['b_hh'],
            params['ln_g'], params['ln_b'],
            w2_row, params['b2'])

    in_specs = [row_spec(d_obs), row_spec(d_act), row_spec(H)] + \
               [weight_spec(a) for a in args[3:]]
    out_specs = (pl.BlockSpec((tn, _LANES), lambda i: (i, 0)),
                 pl.BlockSpec((tn, H), lambda i: (i, 0)))

    kernel = functools.partial(_critic_kernel, n_agents=n_agents, row_tile=tn)

    v_pad, hh_pad = pl.pallas_call(
        kernel,
        grid=(num_blocks,),
        in_specs=in_specs,
        out_specs=out_specs,
        out_shape=(jax.ShapeDtypeStruct((n_pad, _LANES), jnp.float32),
                   jax.ShapeDtypeStruct((n_pad, H), jnp.float32)),
        compiler_params=pltpu.CompilerParams(
            dimension_semantics=("parallel",)),
    )(*args)

    return v_pad[:N, :1], hh_pad[:N]


def rnn_critic_forward(params, obs, last_actions, hidden_states):
    """Mirrors RnnCritic.forward with independent_obs + last_action + agent_id inputs."""
    b, a, _ = obs.shape
    hidden_dim = params['w_hh'].shape[0]
    obs_flat = obs.reshape(b * a, -1)
    act_flat = last_actions.reshape(b * a, -1)
    h_in = hidden_states.reshape(-1, hidden_dim)
    v, hh = rnn_critic_pallas(obs_flat, act_flat, h_in, params, n_agents=a)
    return v.reshape(b, a, 1), hh.reshape(b, a, hidden_dim)


def _reference_forward(params, obs, last_actions, hidden_states):
    """Pure-JAX reference of the same forward pass (for verification)."""
    b, a, _ = obs.shape
    H = params['w_hh'].shape[0]
    agent_id = jnp.broadcast_to(jnp.eye(a, dtype=obs.dtype)[None], (b, a, a))
    inputs = jnp.concatenate([obs, last_actions, agent_id], axis=-1).reshape(b * a, -1)
    h = hidden_states.reshape(-1, H)
    x = jnp.maximum(inputs @ params['w1'] + params['b1'], 0.0)
    gi = x @ params['w_ih'] + params['b_ih']
    gh = h @ params['w_hh'] + params['b_hh']
    r = jax.nn.sigmoid(gi[:, :H] + gh[:, :H])
    z = jax.nn.sigmoid(gi[:, H:2 * H] + gh[:, H:2 * H])
    n = jnp.tanh(gi[:, 2 * H:] + r * gh[:, 2 * H:])
    hh = (1.0 - z) * n + z * h
    mu = jnp.mean(hh, axis=-1, keepdims=True)
    var = jnp.mean((hh - mu) ** 2, axis=-1, keepdims=True)
    xn = (hh - mu) / jnp.sqrt(var + 1e-5) * params['ln_g'] + params['ln_b']
    v = xn @ params['w2'] + params['b2']
    return v.reshape(b, a, 1), hh.reshape(b, a, H)


def _init_params(key, input_shape, hidden_dim):
    ks = jax.random.split(key, 8)
    s = 0.1
    return {
        # fc1: Linear(input_shape, hidden_dim)
        'w1': s * jax.random.normal(ks[0], (input_shape, hidden_dim), jnp.float32),
        'b1': s * jax.random.normal(ks[1], (1, hidden_dim), jnp.float32),
        # GRUCell(hidden_dim, hidden_dim): weight_ih (3H, H) stored transposed as (H, 3H)
        'w_ih': s * jax.random.normal(ks[2], (hidden_dim, 3 * hidden_dim), jnp.float32),
        'b_ih': s * jax.random.normal(ks[3], (1, 3 * hidden_dim), jnp.float32),
        'w_hh': s * jax.random.normal(ks[4], (hidden_dim, 3 * hidden_dim), jnp.float32),
        'b_hh': s * jax.random.normal(ks[5], (1, 3 * hidden_dim), jnp.float32),
        # LayerNorm(hidden_dim)
        'ln_g': jnp.ones((1, hidden_dim), jnp.float32),
        'ln_b': jnp.zeros((1, hidden_dim), jnp.float32),
        # fc2: Linear(hidden_dim, 1)
        'w2': s * jax.random.normal(ks[6], (hidden_dim, 1), jnp.float32),
        'b2': s * jax.random.normal(ks[7], (1, 1), jnp.float32),
    }


if __name__ == "__main__":
    # Small synthetic config consistent with the module's forward.
    b, a = 2, 4            # batch, n_agents
    obs_shape = 10
    n_actions = 5
    hidden_dim = 32
    input_shape = obs_shape + n_actions + a  # independent_obs + last_action + agent_id

    key = jax.random.PRNGKey(0)
    k_obs, k_act, k_h, k_param = jax.random.split(key, 4)
    obs = jax.random.normal(k_obs, (b, a, obs_shape), jnp.float32)
    last_actions = jax.random.normal(k_act, (b, a, n_actions), jnp.float32)
    hidden_states = jax.random.normal(k_h, (b, a, hidden_dim), jnp.float32)
    params = _init_params(k_param, input_shape, hidden_dim)

    v, hh = rnn_critic_forward(params, obs, last_actions, hidden_states)
    jax.block_until_ready((v, hh))

    v_ref, hh_ref = _reference_forward(params, obs, last_actions, hidden_states)
    assert v.shape == (b, a, 1) and hh.shape == (b, a, hidden_dim)
    assert jnp.allclose(v, v_ref, atol=1e-5, rtol=1e-5)
    assert jnp.allclose(hh, hh_ref, atol=1e-5, rtol=1e-5)

    print("KERNEL_OK")
</pallas_src>

<mosaic_0001>
module attributes {stable_mosaic.version = 11 : i64} {
  func.func @_critic_kernel(%arg0: i32, %arg1: memref<8x10xf32, #tpu.memory_space<vmem>>, %arg2: memref<8x5xf32, #tpu.memory_space<vmem>>, %arg3: memref<8x32xf32, #tpu.memory_space<vmem>>, %arg4: memref<10x32xf32, #tpu.memory_space<vmem>>, %arg5: memref<5x32xf32, #tpu.memory_space<vmem>>, %arg6: memref<4x32xf32, #tpu.memory_space<vmem>>, %arg7: memref<1x32xf32, #tpu.memory_space<vmem>>, %arg8: memref<32x96xf32, #tpu.memory_space<vmem>>, %arg9: memref<1x96xf32, #tpu.memory_space<vmem>>, %arg10: memref<32x96xf32, #tpu.memory_space<vmem>>, %arg11: memref<1x96xf32, #tpu.memory_space<vmem>>, %arg12: memref<1x32xf32, #tpu.memory_space<vmem>>, %arg13: memref<1x32xf32, #tpu.memory_space<vmem>>, %arg14: memref<1x32xf32, #tpu.memory_space<vmem>>, %arg15: memref<1x1xf32, #tpu.memory_space<vmem>>, %arg16: memref<8x128xf32, #tpu.memory_space<vmem>>, %arg17: memref<8x32xf32, #tpu.memory_space<vmem>>) attributes {dimension_semantics = [#tpu.dimension_semantics<parallel>], iteration_bounds = array<i64: 1>, scalar_prefetch = 0 : i64, scratch_operands = 0 : i64, tpu.core_type = #tpu.core_type<tc>, window_params = [{transform_indices = @transform_0, window_bounds = array<i64: 8, 10>}, {transform_indices = @transform_1, window_bounds = array<i64: 8, 5>}, {transform_indices = @transform_2, window_bounds = array<i64: 8, 32>}, {pipeline_mode = #tpu.pipeline_mode<synchronous>, transform_indices = @transform_3, window_bounds = array<i64: 10, 32>}, {pipeline_mode = #tpu.pipeline_mode<synchronous>, transform_indices = @transform_4, window_bounds = array<i64: 5, 32>}, {pipeline_mode = #tpu.pipeline_mode<synchronous>, transform_indices = @transform_5, window_bounds = array<i64: 4, 32>}, {pipeline_mode = #tpu.pipeline_mode<synchronous>, transform_indices = @transform_6, window_bounds = array<i64: 1, 32>}, {pipeline_mode = #tpu.pipeline_mode<synchronous>, transform_indices = @transform_7, window_bounds = array<i64: 32, 96>}, {pipeline_mode = #tpu.pipeline_mode<synchronous>, transform_indices = @transform_8, window_bounds = array<i64: 1, 96>}, {pipeline_mode = #tpu.pipeline_mode<synchronous>, transform_indices = @transform_9, window_bounds = array<i64: 32, 96>}, {pipeline_mode = #tpu.pipeline_mode<synchronous>, transform_indices = @transform_10, window_bounds = array<i64: 1, 96>}, {pipeline_mode = #tpu.pipeline_mode<synchronous>, transform_indices = @transform_11, window_bounds = array<i64: 1, 32>}, {pipeline_mode = #tpu.pipeline_mode<synchronous>, transform_indices = @transform_12, window_bounds = array<i64: 1, 32>}, {pipeline_mode = #tpu.pipeline_mode<synchronous>, transform_indices = @transform_13, window_bounds = array<i64: 1, 32>}, {pipeline_mode = #tpu.pipeline_mode<synchronous>, transform_indices = @transform_14, window_bounds = array<i64: 1, 1>}, {transform_indices = @transform_15, window_bounds = array<i64: 8, 128>}, {transform_indices = @transform_16, window_bounds = array<i64: 8, 32>}]} {
    %c0 = arith.constant 0 : index
    %c0_0 = arith.constant 0 : index
    %0 = vector.load %arg1[%c0, %c0_0] : memref<8x10xf32, #tpu.memory_space<vmem>>, vector<8x10xf32>
    %c0_1 = arith.constant 0 : index
    %c0_2 = arith.constant 0 : index
    %1 = vector.load %arg4[%c0_1, %c0_2] : memref<10x32xf32, #tpu.memory_space<vmem>>, vector<10x32xf32>
    %cst = arith.constant dense<0.000000e+00> : vector<8x32xf32>
    %2 = tpu.matmul %0, %1, %cst {dimension_numbers = #tpu.dot_dimension_numbers<[1], [0], [0], [1], [0, 0, 1, 1], [], []>} : vector<8x10xf32>, vector<10x32xf32>, vector<8x32xf32> -> vector<8x32xf32>
    %c0_3 = arith.constant 0 : index
    %c0_4 = arith.constant 0 : index
    %3 = vector.load %arg2[%c0_3, %c0_4] : memref<8x5xf32, #tpu.memory_space<vmem>>, vector<8x5xf32>
    %c0_5 = arith.constant 0 : index
    %c0_6 = arith.constant 0 : index
    %4 = vector.load %arg5[%c0_5, %c0_6] : memref<5x32xf32, #tpu.memory_space<vmem>>, vector<5x32xf32>
    %cst_7 = arith.constant dense<0.000000e+00> : vector<8x32xf32>
    %5 = tpu.matmul %3, %4, %cst_7 {dimension_numbers = #tpu.dot_dimension_numbers<[1], [0], [0], [1], [0, 0, 1, 1], [], []>} : vector<8x5xf32>, vector<5x32xf32>, vector<8x32xf32> -> vector<8x32xf32>
    %6 = arith.addf %2, %5 : vector<8x32xf32>
    %c8_i32 = arith.constant 8 : i32
    %7 = arith.muli %arg0, %c8_i32 : i32
    %8 = tpu.iota {dimensions = array<i32: 0>} : vector<8x4xi32>
    %9 = vector.broadcast %7 : i32 to vector<8x4xi32>
    %10 = arith.addi %9, %8 : vector<8x4xi32>
    %11 = tpu.iota {dimensions = array<i32: 1>} : vector<8x4xi32>
    %c4_i32 = arith.constant 4 : i32
    %c0_i32 = arith.constant 0 : i32
    %12 = arith.cmpi eq, %c4_i32, %c0_i32 : i32
    %c1_i32 = arith.constant 1 : i32
    %13 = arith.select %12, %c1_i32, %c4_i32 : i32
    %14 = vector.broadcast %13 : i32 to vector<8x4xi32>
    %15 = arith.remsi %10, %14 : vector<8x4xi32>
    %c0_i32_8 = arith.constant 0 : i32
    %16 = vector.broadcast %c0_i32_8 : i32 to vector<8x4xi32>
    %17 = arith.cmpi ne, %15, %16 : vector<8x4xi32>
    %c0_i32_9 = arith.constant 0 : i32
    %18 = vector.broadcast %c0_i32_9 : i32 to vector<8x4xi32>
    %19 = arith.cmpi slt, %15, %18 : vector<8x4xi32>
    %c0_i32_10 = arith.constant 0 : i32
    %20 = arith.cmpi slt, %13, %c0_i32_10 : i32
    %21 = vector.broadcast %20 : i1 to vector<8x4xi1>
    %22 = vector.broadcast %21 : vector<8x4xi1> to vector<8x4xi1>
    %23 = arith.xori %19, %22 : vector<8x4xi1>
    %24 = arith.andi %23, %17 : vector<8x4xi1>
    %25 = vector.broadcast %13 : i32 to vector<8x4xi32>
    %26 = arith.addi %15, %25 : vector<8x4xi32>
    %27 = arith.select %24, %26, %15 : vector<8x4xi1>, vector<8x4xi32>
    %28 = arith.cmpi eq, %27, %11 : vector<8x4xi32>
    %29 = arith.extui %28 : vector<8x4xi1> to vector<8x4xi32>
    %30 = arith.sitofp %29 : vector<8x4xi32> to vector<8x4xf32>
    %c0_11 = arith.constant 0 : index
    %c0_12 = arith.constant 0 : index
    %31 = vector.load %arg6[%c0_11, %c0_12] : memref<4x32xf32, #tpu.memory_space<vmem>>, vector<4x32xf32>
    %cst_13 = arith.constant dense<0.000000e+00> : vector<8x32xf32>
    %32 = tpu.matmul %30, %31, %cst_13 {dimension_numbers = #tpu.dot_dimension_numbers<[1], [0], [0], [1], [0, 0, 1, 1], [], []>} : vector<8x4xf32>, vector<4x32xf32>, vector<8x32xf32> -> vector<8x32xf32>
    %33 = arith.addf %6, %32 : vector<8x32xf32>
    %c0_14 = arith.constant 0 : index
    %c0_15 = arith.constant 0 : index
    %34 = vector.load %arg7[%c0_14, %c0_15] : memref<1x32xf32, #tpu.memory_space<vmem>>, vector<1x32xf32>
    %35 = vector.broadcast %34 : vector<1x32xf32> to vector<8x32xf32>
    %36 = arith.addf %33, %35 : vector<8x32xf32>
    %cst_16 = arith.constant 0.000000e+00 : f32
    %37 = vector.broadcast %cst_16 : f32 to vector<8x32xf32>
    %38 = arith.maximumf %36, %37 : vector<8x32xf32>
    %c0_17 = arith.constant 0 : index
    %c0_18 = arith.constant 0 : index
    %39 = vector.load %arg3[%c0_17, %c0_18] : memref<8x32xf32, #tpu.memory_space<vmem>>, vector<8x32xf32>
    %c0_19 = arith.constant 0 : index
    %c0_20 = arith.constant 0 : index
    %40 = vector.load %arg8[%c0_19, %c0_20] : memref<32x96xf32, #tpu.memory_space<vmem>>, vector<32x96xf32>
    %cst_21 = arith.constant dense<0.000000e+00> : vector<8x96xf32>
    %41 = tpu.matmul %38, %40, %cst_21 {dimension_numbers = #tpu.dot_dimension_numbers<[1], [0], [0], [1], [0, 0, 1, 1], [], []>} : vector<8x32xf32>, vector<32x96xf32>, vector<8x96xf32> -> vector<8x96xf32>
    %c0_22 = arith.constant 0 : index
    %c0_23 = arith.constant 0 : index
    %42 = vector.load %arg9[%c0_22, %c0_23] : memref<1x96xf32, #tpu.memory_space<vmem>>, vector<1x96xf32>
    %43 = vector.broadcast %42 : vector<1x96xf32> to vector<8x96xf32>
    %44 = arith.addf %41, %43 : vector<8x96xf32>
    %c0_24 = arith.constant 0 : index
    %c0_25 = arith.constant 0 : index
    %45 = vector.load %arg10[%c0_24, %c0_25] : memref<32x96xf32, #tpu.memory_space<vmem>>, vector<32x96xf32>
    %cst_26 = arith.constant dense<0.000000e+00> : vector<8x96xf32>
    %46 = tpu.matmul %39, %45, %cst_26 {dimension_numbers = #tpu.dot_dimension_numbers<[1], [0], [0], [1], [0, 0, 1, 1], [], []>} : vector<8x32xf32>, vector<32x96xf32>, vector<8x96xf32> -> vector<8x96xf32>
    %c0_27 = arith.constant 0 : index
    %c0_28 = arith.constant 0 : index
    %47 = vector.load %arg11[%c0_27, %c0_28] : memref<1x96xf32, #tpu.memory_space<vmem>>, vector<1x96xf32>
    %48 = vector.broadcast %47 : vector<1x96xf32> to vector<8x96xf32>
    %49 = arith.addf %46, %48 : vector<8x96xf32>
    %50 = vector.extract_strided_slice %44 {offsets = [0, 0], sizes = [8, 32], strides = [1, 1]} : vector<8x96xf32> to vector<8x32xf32>
    %51 = vector.extract_strided_slice %49 {offsets = [0, 0], sizes = [8, 32], strides = [1, 1]} : vector<8x96xf32> to vector<8x32xf32>
    %52 = arith.addf %50, %51 : vector<8x32xf32>
    %53 = arith.negf %52 : vector<8x32xf32>
    %54 = math.exp %53 : vector<8x32xf32>
    %cst_29 = arith.constant 1.000000e+00 : f32
    %55 = vector.broadcast %cst_29 : f32 to vector<8x32xf32>
    %56 = arith.addf %55, %54 : vector<8x32xf32>
    %57 = arith.divf %55, %56 : vector<8x32xf32>
    %58 = vector.extract_strided_slice %44 {offsets = [0, 32], sizes = [8, 32], strides = [1, 1]} : vector<8x96xf32> to vector<8x32xf32>
    %59 = vector.extract_strided_slice %49 {offsets = [0, 32], sizes = [8, 32], strides = [1, 1]} : vector<8x96xf32> to vector<8x32xf32>
    %60 = arith.addf %58, %59 : vector<8x32xf32>
    %61 = arith.negf %60 : vector<8x32xf32>
    %62 = math.exp %61 : vector<8x32xf32>
    %cst_30 = arith.constant 1.000000e+00 : f32
    %63 = vector.broadcast %cst_30 : f32 to vector<8x32xf32>
    %64 = arith.addf %63, %62 : vector<8x32xf32>
    %65 = arith.divf %63, %64 : vector<8x32xf32>
    %66 = vector.extract_strided_slice %44 {offsets = [0, 64], sizes = [8, 32], strides = [1, 1]} : vector<8x96xf32> to vector<8x32xf32>
    %67 = vector.extract_strided_slice %49 {offsets = [0, 64], sizes = [8, 32], strides = [1, 1]} : vector<8x96xf32> to vector<8x32xf32>
    %68 = arith.mulf %57, %67 : vector<8x32xf32>
    %69 = arith.addf %66, %68 : vector<8x32xf32>
    %70 = math.tanh %69 : vector<8x32xf32>
    %cst_31 = arith.constant 1.000000e+00 : f32
    %71 = vector.broadcast %cst_31 : f32 to vector<8x32xf32>
    %72 = arith.subf %71, %65 : vector<8x32xf32>
    %73 = arith.mulf %72, %70 : vector<8x32xf32>
    %74 = arith.mulf %65, %39 : vector<8x32xf32>
    %75 = arith.addf %73, %74 : vector<8x32xf32>
    %c0_32 = arith.constant 0 : index
    %c0_33 = arith.constant 0 : index
    %76 = vector.load %arg17[%c0_32, %c0_33] : memref<8x32xf32, #tpu.memory_space<vmem>>, vector<8x32xf32>
    tpu.vector_store %arg17[%c0_32, %c0_33], %75 {strides = array<i32>} : memref<8x32xf32, #tpu.memory_space<vmem>>, vector<8x32xf32>,
    %cst_34 = arith.constant dense<0.000000e+00> : vector<8xf32>
    %77 = vector.multi_reduction <add>, %75, %cst_34 [1] : vector<8x32xf32> to vector<8xf32>
    %78 = vector.shape_cast %77 : vector<8xf32> to vector<8x1xf32>
    %cst_35 = arith.constant 3.200000e+01 : f32
    %79 = vector.broadcast %cst_35 : f32 to vector<8x1xf32>
    %80 = arith.divf %78, %79 : vector<8x1xf32>
    %81 = vector.broadcast %80 : vector<8x1xf32> to vector<8x32xf32>
    %82 = arith.subf %75, %81 : vector<8x32xf32>
    %83 = arith.mulf %82, %82 : vector<8x32xf32>
    %cst_36 = arith.constant dense<0.000000e+00> : vector<8xf32>
    %84 = vector.multi_reduction <add>, %83, %cst_36 [1] : vector<8x32xf32> to vector<8xf32>
    %85 = vector.shape_cast %84 : vector<8xf32> to vector<8x1xf32>
    %cst_37 = arith.constant 3.200000e+01 : f32
    %86 = vector.broadcast %cst_37 : f32 to vector<8x1xf32>
    %87 = arith.divf %85, %86 : vector<8x1xf32>
    %88 = vector.broadcast %80 : vector<8x1xf32> to vector<8x32xf32>
    %89 = arith.subf %75, %88 : vector<8x32xf32>
    %cst_38 = arith.constant 9.99999974E-6 : f32
    %90 = vector.broadcast %cst_38 : f32 to vector<8x1xf32>
    %91 = arith.addf %87, %90 : vector<8x1xf32>
    %92 = math.rsqrt %91 : vector<8x1xf32>
    %93 = vector.broadcast %92 : vector<8x1xf32> to vector<8x32xf32>
    %94 = arith.mulf %89, %93 : vector<8x32xf32>
    %c0_39 = arith.constant 0 : index
    %c0_40 = arith.constant 0 : index
    %95 = vector.load %arg12[%c0_39, %c0_40] : memref<1x32xf32, #tpu.memory_space<vmem>>, vector<1x32xf32>
    %96 = vector.broadcast %95 : vector<1x32xf32> to vector<8x32xf32>
    %97 = arith.mulf %94, %96 : vector<8x32xf32>
    %c0_41 = arith.constant 0 : index
    %c0_42 = arith.constant 0 : index
    %98 = vector.load %arg13[%c0_41, %c0_42] : memref<1x32xf32, #tpu.memory_space<vmem>>, vector<1x32xf32>
    %99 = vector.broadcast %98 : vector<1x32xf32> to vector<8x32xf32>
    %100 = arith.addf %97, %99 : vector<8x32xf32>
    %c0_43 = arith.constant 0 : index
    %c0_44 = arith.constant 0 : index
    %101 = vector.load %arg14[%c0_43, %c0_44] : memref<1x32xf32, #tpu.memory_space<vmem>>, vector<1x32xf32>
    %102 = vector.broadcast %101 : vector<1x32xf32> to vector<8x32xf32>
    %103 = arith.mulf %100, %102 : vector<8x32xf32>
    %cst_45 = arith.constant dense<0.000000e+00> : vector<8xf32>
    %104 = vector.multi_reduction <add>, %103, %cst_45 [1] : vector<8x32xf32> to vector<8xf32>
    %105 = vector.shape_cast %104 : vector<8xf32> to vector<8x1xf32>
    %c0_46 = arith.constant 0 : index
    %c0_47 = arith.constant 0 : index
    %106 = vector.load %arg15[%c0_46, %c0_47] : memref<1x1xf32, #tpu.memory_space<vmem>>, vector<1x1xf32>
    %107 = vector.broadcast %106 : vector<1x1xf32> to vector<8x1xf32>
    %108 = arith.addf %105, %107 : vector<8x1xf32>
    %109 = vector.shape_cast %108 : vector<8x1xf32> to vector<8x1xf32>
    %110 = vector.broadcast %109 : vector<8x1xf32> to vector<8x128xf32>
    %c0_48 = arith.constant 0 : index
    %c0_49 = arith.constant 0 : index
    %111 = vector.load %arg16[%c0_48, %c0_49] : memref<8x128xf32, #tpu.memory_space<vmem>>, vector<8x128xf32>
    tpu.vector_store %arg16[%c0_48, %c0_49], %110 {strides = array<i32>} : memref<8x128xf32, #tpu.memory_space<vmem>>, vector<8x128xf32>,
    return
  }
  func.func @transform_0(%arg0: i32) -> (i32, i32) {
    %c0_i32 = arith.constant 0 : i32
    %c0_i32_0 = arith.constant 0 : i32
    return %arg0, %c0_i32 : i32, i32
  }
  func.func @transform_1(%arg0: i32) -> (i32, i32) {
    %c0_i32 = arith.constant 0 : i32
    %c0_i32_0 = arith.constant 0 : i32
    return %arg0, %c0_i32 : i32, i32
  }
  func.func @transform_2(%arg0: i32) -> (i32, i32) {
    %c0_i32 = arith.constant 0 : i32
    %c0_i32_0 = arith.constant 0 : i32
    return %arg0, %c0_i32 : i32, i32
  }
  func.func @transform_3(%arg0: i32) -> (i32, i32) {
    %c0_i32 = arith.constant 0 : i32
    %c0_i32_0 = arith.constant 0 : i32
    %c0_i32_1 = arith.constant 0 : i32
    return %c0_i32, %c0_i32_0 : i32, i32
  }
  func.func @transform_4(%arg0: i32) -> (i32, i32) {
    %c0_i32 = arith.constant 0 : i32
    %c0_i32_0 = arith.constant 0 : i32
    %c0_i32_1 = arith.constant 0 : i32
    return %c0_i32, %c0_i32_0 : i32, i32
  }
  func.func @transform_5(%arg0: i32) -> (i32, i32) {
    %c0_i32 = arith.constant 0 : i32
    %c0_i32_0 = arith.constant 0 : i32
    %c0_i32_1 = arith.constant 0 : i32
    return %c0_i32, %c0_i32_0 : i32, i32
  }
  func.func @transform_6(%arg0: i32) -> (i32, i32) {
    %c0_i32 = arith.constant 0 : i32
    %c0_i32_0 = arith.constant 0 : i32
    %c0_i32_1 = arith.constant 0 : i32
    return %c0_i32, %c0_i32_0 : i32, i32
  }
  func.func @transform_7(%arg0: i32) -> (i32, i32) {
    %c0_i32 = arith.constant 0 : i32
    %c0_i32_0 = arith.constant 0 : i32
    %c0_i32_1 = arith.constant 0 : i32
    return %c0_i32, %c0_i32_0 : i32, i32
  }
  func.func @transform_8(%arg0: i32) -> (i32, i32) {
    %c0_i32 = arith.constant 0 : i32
    %c0_i32_0 = arith.constant 0 : i32
    %c0_i32_1 = arith.constant 0 : i32
    return %c0_i32, %c0_i32_0 : i32, i32
  }
  func.func @transform_9(%arg0: i32) -> (i32, i32) {
    %c0_i32 = arith.constant 0 : i32
    %c0_i32_0 = arith.constant 0 : i32
    %c0_i32_1 = arith.constant 0 : i32
    return %c0_i32, %c0_i32_0 : i32, i32
  }
  func.func @transform_10(%arg0: i32) -> (i32, i32) {
    %c0_i32 = arith.constant 0 : i32
    %c0_i32_0 = arith.constant 0 : i32
    %c0_i32_1 = arith.constant 0 : i32
    return %c0_i32, %c0_i32_0 : i32, i32
  }
  func.func @transform_11(%arg0: i32) -> (i32, i32) {
    %c0_i32 = arith.constant 0 : i32
    %c0_i32_0 = arith.constant 0 : i32
    %c0_i32_1 = arith.constant 0 : i32
    return %c0_i32, %c0_i32_0 : i32, i32
  }
  func.func @transform_12(%arg0: i32) -> (i32, i32) {
    %c0_i32 = arith.constant 0 : i32
    %c0_i32_0 = arith.constant 0 : i32
    %c0_i32_1 = arith.constant 0 : i32
    return %c0_i32, %c0_i32_0 : i32, i32
  }
  func.func @transform_13(%arg0: i32) -> (i32, i32) {
    %c0_i32 = arith.constant 0 : i32
    %c0_i32_0 = arith.constant 0 : i32
    %c0_i32_1 = arith.constant 0 : i32
    return %c0_i32, %c0_i32_0 : i32, i32
  }
  func.func @transform_14(%arg0: i32) -> (i32, i32) {
    %c0_i32 = arith.constant 0 : i32
    %c0_i32_0 = arith.constant 0 : i32
    %c0_i32_1 = arith.constant 0 : i32
    return %c0_i32, %c0_i32_0 : i32, i32
  }
  func.func @transform_15(%arg0: i32) -> (i32, i32) {
    %c0_i32 = arith.constant 0 : i32
    %c0_i32_0 = arith.constant 0 : i32
    return %arg0, %c0_i32 : i32, i32
  }
  func.func @transform_16(%arg0: i32) -> (i32, i32) {
    %c0_i32 = arith.constant 0 : i32
    %c0_i32_0 = arith.constant 0 : i32
    return %arg0, %c0_i32 : i32, i32
  }
}

</mosaic_0001>

<llo_original>
// kernel: tpu_custom_call.1
$region0: #{tpu_custom_call.1}
  #allocation0 [shape = 'u32[]', space=smem, size = 0x4, offset = 0x4, fixed_abs, tag = 'smem constant byte address 0x4 - core index']
  #allocation1 [shape = 'u32[144,128]{1,0:T(1,128)}', space=vmem, size = 0x12000, scoped, tag = 'internal scratch']
  #allocation2 [shape = 'f32[1,1]{1,0:T(1,128)S(1)}', space=vmem, size = 0x200, scoped, tag = 'scoped memory for tpu_custom_call.1']
  %s0 = inlined_call_operand.hbm [shape: f32[8,10], index: 0, kind: input, shape index: {}]
  %s1 = inlined_call_operand.hbm [shape: f32[8,5], index: 1, kind: input, shape index: {}]
  %s2 = inlined_call_operand.hbm [shape: f32[8,32], index: 2, kind: input, shape index: {}]
  %s3 = inlined_call_operand.hbm [shape: f32[10,32], index: 3, kind: input, shape index: {}]
  %s4 = inlined_call_operand.hbm [shape: f32[5,32], index: 4, kind: input, shape index: {}]
  %s5 = inlined_call_operand.vmem [shape: f32[4,32], index: 5, kind: input, shape index: {}]
  %s6 = inlined_call_operand.vmem [shape: f32[1,32], index: 6, kind: input, shape index: {}]
  %s7 = inlined_call_operand.hbm [shape: f32[32,96], index: 7, kind: input, shape index: {}]
  %s8 = inlined_call_operand.hbm [shape: f32[1,96], index: 8, kind: input, shape index: {}]
  %s9 = inlined_call_operand.vmem [shape: f32[32,96], index: 9, kind: input, shape index: {}]
  %s10 = inlined_call_operand.vmem [shape: f32[1,96], index: 10, kind: input, shape index: {}]
  %s11 = inlined_call_operand.vmem [shape: f32[1,32], index: 11, kind: input, shape index: {}]
  %s12 = inlined_call_operand.vmem [shape: f32[1,32], index: 12, kind: input, shape index: {}]
  %s13 = inlined_call_operand.vmem [shape: f32[1,32], index: 13, kind: input, shape index: {}]
  %s14 = inlined_call_operand.<no memory space> [shape: f32[1,1], index: 14, kind: input, shape index: {}]
  %s15 = inlined_call_operand.hbm [shape: f32[8,128], index: 15, kind: output, shape index: {0}]
  %s16 = inlined_call_operand.hbm [shape: f32[8,32], index: 16, kind: output, shape index: {1}]
  %17 = xla_tuple %s15, %s16
  %s18 = sld [smem:[#allocation0]]
  $region106: #{tpu_custom_call.1} parent=0
    _
  %s20 = ssub.s32 1, %s18
  %s21 = scalar_select 0, %s20, %s18
  %v22 = vstv %s14
  %23 = vst [vmem:[#allocation2] sm:$0x1] %v22
  $region1: #{tpu_custom_call.1} parent=0
    #allocation3 [shape = 'u8[4096]{0}', space=vmem, size = 0x1000, scoped, tag = 'input window, operand 0, single buffered']
    #allocation4 [shape = 's32[1]{0}', space=sflag, size = 0x4, scoped, tag = 'scoped memory for tpu_custom_call.1']
    #allocation5 [shape = 's32[1]{0}', space=sflag, size = 0x4, scoped, tag = 'scoped memory for tpu_custom_call.1']
    #allocation6 [shape = 'u8[4096]{0}', space=vmem, size = 0x1000, scoped, tag = 'input window, operand 1, single buffered']
    #allocation7 [shape = 's32[1]{0}', space=sflag, size = 0x4, scoped, tag = 'scoped memory for tpu_custom_call.1']
    #allocation8 [shape = 'u8[4096]{0}', space=vmem, size = 0x1000, scoped, tag = 'input window, operand 2, single buffered']
    #allocation9 [shape = 'u8[8192]{0}', space=vmem, size = 0x2000, scoped, tag = 'input window, operand 3, single buffered']
    #allocation10 [shape = 's32[1]{0}', space=sflag, size = 0x4, scoped, tag = 'scoped memory for tpu_custom_call.1']
    #allocation11 [shape = 'u8[4096]{0}', space=vmem, size = 0x1000, scoped, tag = 'input window, operand 4, single buffered']
    #allocation12 [shape = 'u8[16384]{0}', space=vmem, size = 0x4000, scoped, tag = 'input window, operand 7, single buffered']
    #allocation13 [shape = 's32[1]{0}', space=sflag, size = 0x4, scoped, tag = 'scoped memory for tpu_custom_call.1']
    #allocation14 [shape = 'u8[512]{0}', space=vmem, size = 0x400, scoped, tag = 'input window, operand 8, single buffered']
    #allocation15 [shape = 'u8[4096]{0}', space=vmem, size = 0x1000, scoped, tag = 'output window, operand 0, single buffered']
    #allocation16 [shape = 'u8[4096]{0}', space=vmem, size = 0x1000, scoped, tag = 'output window, operand 1, single buffered']
    #allocation17 [shape = 's32[1]{0}', space=sflag, size = 0x4, scoped, tag = 'scoped memory for tpu_custom_call.1']
    %24 = vsyncpa [#allocation4], 0
    %25 = vsyncpa [#allocation7], 0
    %26 = vsyncpa [#allocation10], 0
    %27 = vsyncpa [#allocation13], 0
    %28 = vsyncpa [#allocation5], 0
    %29 = vsyncpa [#allocation17], 0
    // Predicated region
    $region2: #{tpu_custom_call.1} parent=1 // pred_check
      _
    $region3: #{tpu_custom_call.1} parent=1 // pred_check_branch
      %31 = sbr.rel (0) target = $region5
    $region4: #{tpu_custom_call.1} parent=1 // pred_region
      %s33 = ssub.s32 128, 128
      %34 = vsyncadd [#allocation4], %s33
      %s36 = sshll.u32 [#allocation3], 4
      %s37 = int_to_ptr.vmem [resolvable:$true] %s36
      %39 = dma.hbm_to_vmem [thread:$0]  %s0, 128, %s37, [#allocation4]
    $region5: #{tpu_custom_call.1} parent=1 // pred_fallthru
      _
    // Predicated region
    $region6: #{tpu_custom_call.1} parent=1 // pred_check
      _
    $region7: #{tpu_custom_call.1} parent=1 // pred_check_branch
      %41 = sbr.rel (0) target = $region9
    $region8: #{tpu_custom_call.1} parent=1 // pred_region
      %s43 = ssub.s32 128, 128
      %44 = vsyncadd [#allocation7], %s43
      %s46 = sshll.u32 [#allocation6], 4
      %s47 = int_to_ptr.vmem [resolvable:$true] %s46
      %49 = dma.hbm_to_vmem [thread:$0]  %s1, 128, %s47, [#allocation7]
    $region9: #{tpu_custom_call.1} parent=1 // pred_fallthru
      _
    // Predicated region
    $region10: #{tpu_custom_call.1} parent=1 // pred_check
      _
    $region11: #{tpu_custom_call.1} parent=1 // pred_check_branch
      %51 = sbr.rel (0) target = $region13
    $region12: #{tpu_custom_call.1} parent=1 // pred_region
      %s53 = ssub.s32 128, 128
      %54 = vsyncadd [#allocation7], %s53
      %s56 = sshll.u32 [#allocation8], 4
      %s57 = int_to_ptr.vmem [resolvable:$true] %s56
      %59 = dma.hbm_to_vmem [thread:$0]  %s2, 128, %s57, [#allocation7]
    $region13: #{tpu_custom_call.1} parent=1 // pred_fallthru
      _
    // Predicated region
    $region14: #{tpu_custom_call.1} parent=1 // pred_check
      _
    $region15: #{tpu_custom_call.1} parent=1 // pred_check_branch
      %61 = sbr.rel (0) target = $region17
    $region16: #{tpu_custom_call.1} parent=1 // pred_region
      %s63 = ssub.s32 256, 256
      %64 = vsyncadd [#allocation10], %s63
      %s65 = sshll.u32 [#allocation9], 4
      %s66 = int_to_ptr.vmem [resolvable:$true] %s65
      %71 = dma.hbm_to_vmem [thread:$0]  %s3, 256, %s66, [#allocation10], 128, 128, 8
    $region17: #{tpu_custom_call.1} parent=1 // pred_fallthru
      _
    // Predicated region
    $region18: #{tpu_custom_call.1} parent=1 // pred_check
      _
    $region19: #{tpu_custom_call.1} parent=1 // pred_check_branch
      %73 = sbr.rel (0) target = $region21
    $region20: #{tpu_custom_call.1} parent=1 // pred_region
      %s75 = ssub.s32 128, 128
      %76 = vsyncadd [#allocation10], %s75
      %s78 = sshll.u32 [#allocation11], 4
      %s79 = int_to_ptr.vmem [resolvable:$true] %s78
      %81 = dma.hbm_to_vmem [thread:$0]  %s4, 128, %s79, [#allocation10]
    $region21: #{tpu_custom_call.1} parent=1 // pred_fallthru
      _
    // Predicated region
    $region22: #{tpu_custom_call.1} parent=1 // pred_check
      _
    $region23: #{tpu_custom_call.1} parent=1 // pred_check_branch
      %83 = sbr.rel (0) target = $region25
    $region24: #{tpu_custom_call.1} parent=1 // pred_region
      _
    $region25: #{tpu_custom_call.1} parent=1 // pred_fallthru
      _
    // Predicated region
    $region26: #{tpu_custom_call.1} parent=1 // pred_check
      _
    $region27: #{tpu_custom_call.1} parent=1 // pred_check_branch
      %85 = sbr.rel (0) target = $region29
    $region28: #{tpu_custom_call.1} parent=1 // pred_region
      _
    $region29: #{tpu_custom_call.1} parent=1 // pred_fallthru
      _
    // Predicated region
    $region30: #{tpu_custom_call.1} parent=1 // pred_check
      _
    $region31: #{tpu_custom_call.1} parent=1 // pred_check_branch
      %87 = sbr.rel (0) target = $region33
    $region32: #{tpu_custom_call.1} parent=1 // pred_region
      %s89 = ssub.s32 512, 512
      %90 = vsyncadd [#allocation13], %s89
      %s91 = sshll.u32 [#allocation12], 4
      %s92 = int_to_ptr.vmem [resolvable:$true] %s91
      %97 = dma.hbm_to_vmem [thread:$0]  %s7, 512, %s92, [#allocation13], 128, 128, 8
    $region33: #{tpu_custom_call.1} parent=1 // pred_fallthru
      _
    // Predicated region
    $region34: #{tpu_custom_call.1} parent=1 // pred_check
      _
    $region35: #{tpu_custom_call.1} parent=1 // pred_check_branch
      %99 = sbr.rel (0) target = $region37
    $region36: #{tpu_custom_call.1} parent=1 // pred_region
      %s101 = ssub.s32 16, 16
      %102 = vsyncadd [#allocation13], %s101
      %s104 = sshll.u32 [#allocation14], 4
      %s105 = int_to_ptr.vmem [resolvable:$true] %s104
      %107 = dma.hbm_to_vmem [thread:$0]  %s8, 16, %s105, [#allocation13]
    $region37: #{tpu_custom_call.1} parent=1 // pred_fallthru
      _
    // Predicated region
    $region38: #{tpu_custom_call.1} parent=1 // pred_check
      _
    $region39: #{tpu_custom_call.1} parent=1 // pred_check_branch
      %109 = sbr.rel (0) target = $region41
    $region40: #{tpu_custom_call.1} parent=1 // pred_region
      _
    $region41: #{tpu_custom_call.1} parent=1 // pred_fallthru
      _
    // Predicated region
    $region42: #{tpu_custom_call.1} parent=1 // pred_check
      _
    $region43: #{tpu_custom_call.1} parent=1 // pred_check_branch
      %111 = sbr.rel (0) target = $region45
    $region44: #{tpu_custom_call.1} parent=1 // pred_region
      _
    $region45: #{tpu_custom_call.1} parent=1 // pred_fallthru
      _
    // Predicated region
    $region46: #{tpu_custom_call.1} parent=1 // pred_check
      _
    $region47: #{tpu_custom_call.1} parent=1 // pred_check_branch
      %113 = sbr.rel (0) target = $region49
    $region48: #{tpu_custom_call.1} parent=1 // pred_region
      _
    $region49: #{tpu_custom_call.1} parent=1 // pred_fallthru
      _
    // Predicated region
    $region50: #{tpu_custom_call.1} parent=1 // pred_check
      _
    $region51: #{tpu_custom_call.1} parent=1 // pred_check_branch
      %115 = sbr.rel (0) target = $region53
    $region52: #{tpu_custom_call.1} parent=1 // pred_region
      _
    $region53: #{tpu_custom_call.1} parent=1 // pred_fallthru
      _
    // Predicated region
    $region54: #{tpu_custom_call.1} parent=1 // pred_check
      _
    $region55: #{tpu_custom_call.1} parent=1 // pred_check_branch
      %117 = sbr.rel (0) target = $region57
    $region56: #{tpu_custom_call.1} parent=1 // pred_region
      _
    $region57: #{tpu_custom_call.1} parent=1 // pred_fallthru
      _
    // Predicated region
    $region58: #{tpu_custom_call.1} parent=1 // pred_check
      _
    $region59: #{tpu_custom_call.1} parent=1 // pred_check_branch
      %119 = sbr.rel (0) target = $region61
    $region60: #{tpu_custom_call.1} parent=1 // pred_region
      _
    $region61: #{tpu_custom_call.1} parent=1 // pred_fallthru
      _
    // Predicated region
    $region62: #{tpu_custom_call.1} parent=1 // pred_check
      _
    $region63: #{tpu_custom_call.1} parent=1 // pred_check_branch
      %121 = sbr.rel (0) target = $region65
    $region64: #{tpu_custom_call.1} parent=1 // pred_region
      %122 = dma.done [#allocation4], 128
    $region65: #{tpu_custom_call.1} parent=1 // pred_fallthru
      _
    // Predicated region
    $region66: #{tpu_custom_call.1} parent=1 // pred_check
      _
    $region67: #{tpu_custom_call.1} parent=1 // pred_check_branch
      %124 = sbr.rel (0) target = $region69
    $region68: #{tpu_custom_call.1} parent=1 // pred_region
      %125 = dma.done [#allocation7], 128
    $region69: #{tpu_custom_call.1} parent=1 // pred_fallthru
      _
    // Predicated region
    $region70: #{tpu_custom_call.1} parent=1 // pred_check
      _
    $region71: #{tpu_custom_call.1} parent=1 // pred_check_branch
      %127 = sbr.rel (0) target = $region73
    $region72: #{tpu_custom_call.1} parent=1 // pred_region
      %128 = dma.done [#allocation7], 128
    $region73: #{tpu_custom_call.1} parent=1 // pred_fallthru
      _
    // Predicated region
    $region74: #{tpu_custom_call.1} parent=1 // pred_check
      _
    $region75: #{tpu_custom_call.1} parent=1 // pred_check_branch
      %130 = sbr.rel (0) target = $region77
    $region76: #{tpu_custom_call.1} parent=1 // pred_region
      %131 = dma.done [#allocation10], 256
    $region77: #{tpu_custom_call.1} parent=1 // pred_fallthru
      _
    // Predicated region
    $region78: #{tpu_custom_call.1} parent=1 // pred_check
      _
    $region79: #{tpu_custom_call.1} parent=1 // pred_check_branch
      %133 = sbr.rel (0) target = $region81
    $region80: #{tpu_custom_call.1} parent=1 // pred_region
      %134 = dma.done [#allocation10], 128
    $region81: #{tpu_custom_call.1} parent=1 // pred_fallthru
      _
    // Predicated region
    $region82: #{tpu_custom_call.1} parent=1 // pred_check
      _
    $region83: #{tpu_custom_call.1} parent=1 // pred_check_branch
      %136 = sbr.rel (0) target = $region85
    $region84: #{tpu_custom_call.1} parent=1 // pred_region
      %137 = dma.done [#allocation13], 512
    $region85: #{tpu_custom_call.1} parent=1 // pred_fallthru
      _
    // Predicated region
    $region86: #{tpu_custom_call.1} parent=1 // pred_check
      _
    $region87: #{tpu_custom_call.1} parent=1 // pred_check_branch
      %139 = sbr.rel (0) target = $region89
    $region88: #{tpu_custom_call.1} parent=1 // pred_region
      %140 = dma.done [#allocation13], 16
    $region89: #{tpu_custom_call.1} parent=1 // pred_fallthru
      _
    %v141 = vld [vmem:[#allocation3] sm:$0xff]
    %v142 = vld [vmem:[#allocation9] sm:$0xff]
    %v143 = vld [vmem:[#allocation9 + $0x8] sm:$0x3]
    %v144 = vld [vmem:[#allocation6] sm:$0xff]
    %v145 = vld [vmem:[#allocation11] sm:$0x1f]
    %vm146 = vcmask 39936
    %v148 = vsel %vm146, %v144, 0
    %vm150 = vcmask 1044480
    %v152 = vsel %vm150, %v145, 0
    %154 = vmatprep.subr.mxu0 0.0
    %155 = vmatpush1.msra.mxu0 %v152
    %156 = vmatprep.subr.mxu0 0.0
    %157 = vmatpush1.msra.mxu0 0.0
    %158 = vmatprep.subr.mxu0 0.0
    %159 = vmatpush1.msra.mxu0 0.0
    %160 = vmatprep.subr.mxu0 0.0
    %161 = vmatpush1.msra.mxu0 0.0
    %162 = vmatprep.subr.mxu0 0.0
    %163 = vmatpush1.msra.mxu0 0.0
    %164 = vmatprep.subr.mxu0 0.0
    %165 = vmatpush1.msra.mxu0 0.0
    %166 = vmatprep.subr.mxu0 0.0
    %167 = vmatpush1.msra.mxu0 0.0
    %168 = vmatprep.subr.mxu0 0.0
    %169 = vmatpush1.msra.mxu0 0.0
    %170 = vmatprep.subr.mxu0 0.0
    %171 = vmatpush1.msra.mxu0 0.0
    %172 = vmatprep.subr.mxu0 0.0
    %173 = vmatpush1.msra.mxu0 0.0
    %174 = vmatprep.subr.mxu0 0.0
    %175 = vmatpush1.msra.mxu0 0.0
    %176 = vmatprep.subr.mxu0 0.0
    %177 = vmatpush1.msra.mxu0 0.0
    %178 = vmatprep.subr.mxu0 0.0
    %179 = vmatpush1.msra.mxu0 0.0
    %180 = vmatprep.subr.mxu0 0.0
    %181 = vmatpush1.msra.mxu0 0.0
    %182 = vmatprep.subr.mxu0 0.0
    %183 = vmatpush1.msra.mxu0 0.0
    %184 = vmatprep.subr.mxu0 0.0
    %185 = vmatpush1.msra.mxu0 0.0
    %186 = vmatprep.subr.mxu0 0.0
    %187 = vmatpush1.msra.mxu0 0.0
    %188 = vmatprep.subr.mxu0 0.0
    %189 = vmatpush1.msra.mxu0 0.0
    %190 = vmatprep.subr.mxu0 0.0
    %191 = vmatpush1.msra.mxu0 0.0
    %192 = vmatprep.subr.mxu0 0.0
    %193 = vmatpush1.msra.mxu0 0.0
    %194 = vmatprep.subr.mxu0 0.0
    %195 = vmatpush1.msra.mxu0 0.0
    %196 = vmatprep.subr.mxu0 0.0
    %197 = vmatpush1.msra.mxu0 0.0
    %198 = vmatprep.subr.mxu0 0.0
    %199 = vmatpush1.msra.mxu0 0.0
    %200 = vmatprep.subr.mxu0 0.0
    %201 = vmatpush1.msra.mxu0 0.0
    %202 = vmatprep.subr.mxu0 0.0
    %203 = vmatpush1.msra.mxu0 0.0
    %204 = vmatprep.subr.mxu0 0.0
    %205 = vmatpush1.msra.mxu0 0.0
    %206 = vmatprep.subr.mxu0 0.0
    %207 = vmatpush1.msra.mxu0 0.0
    %208 = vmatprep.subr.mxu0 0.0
    %209 = vmatpush1.msra.mxu0 0.0
    %210 = vmatprep.subr.mxu0 0.0
    %211 = vmatpush1.msra.mxu0 0.0
    %212 = vmatprep.subr.mxu0 0.0
    %213 = vmatpush1.msra.mxu0 0.0
    %214 = vmatprep.subr.mxu0 0.0
    %215 = vmatpush1.msra.mxu0 0.0
    %216 = vmatprep.subr.mxu0 0.0
    %217 = vmatpush1.msra.mxu0 0.0
    %218 = vmatprep.mubr.f32.mxu0 0.0
    %219 = vmatmul.mubr.f32.gmra.mrb[0].mxu0 %v148
    %v220 = vpop.f32.mrb[0].mxu0
    %v221 = vadd.f32 0.0, %v220
    %v222 = vpop.f32.mrb[0].mxu0
    %223 = vdwg.mxu0
    %vm224 = vcmask 80896
    %v226 = vsel %vm224, %v141, 0
    %vm228 = vcmask 1041408
    %v230 = vsel %vm228, %v143, 0
    %232 = vmatprep.subr.mxu0 0.0
    %233 = vmatpush1.msra.mxu0 %v142
    %234 = vmatprep.subr.mxu0 0.0
    %235 = vmatpush1.msra.mxu0 %v230
    %236 = vmatprep.subr.mxu0 0.0
    %237 = vmatpush1.msra.mxu0 0.0
    %238 = vmatprep.subr.mxu0 0.0
    %239 = vmatpush1.msra.mxu0 0.0
    %240 = vmatprep.subr.mxu0 0.0
    %241 = vmatpush1.msra.mxu0 0.0
    %242 = vmatprep.subr.mxu0 0.0
    %243 = vmatpush1.msra.mxu0 0.0
    %244 = vmatprep.subr.mxu0 0.0
    %245 = vmatpush1.msra.mxu0 0.0
    %246 = vmatprep.subr.mxu0 0.0
    %247 = vmatpush1.msra.mxu0 0.0
    %248 = vmatprep.subr.mxu0 0.0
    %249 = vmatpush1.msra.mxu0 0.0
    %250 = vmatprep.subr.mxu0 0.0
    %251 = vmatpush1.msra.mxu0 0.0
    %252 = vmatprep.subr.mxu0 0.0
    %253 = vmatpush1.msra.mxu0 0.0
    %254 = vmatprep.subr.mxu0 0.0
    %255 = vmatpush1.msra.mxu0 0.0
    %256 = vmatprep.subr.mxu0 0.0
    %257 = vmatpush1.msra.mxu0 0.0
    %258 = vmatprep.subr.mxu0 0.0
    %259 = vmatpush1.msra.mxu0 0.0
    %260 = vmatprep.subr.mxu0 0.0
    %261 = vmatpush1.msra.mxu0 0.0
    %262 = vmatprep.subr.mxu0 0.0
    %263 = vmatpush1.msra.mxu0 0.0
    %264 = vmatprep.subr.mxu0 0.0
    %265 = vmatpush1.msra.mxu0 0.0
    %266 = vmatprep.subr.mxu0 0.0
    %267 = vmatpush1.msra.mxu0 0.0
    %268 = vmatprep.subr.mxu0 0.0
    %269 = vmatpush1.msra.mxu0 0.0
    %270 = vmatprep.subr.mxu0 0.0
    %271 = vmatpush1.msra.mxu0 0.0
    %272 = vmatprep.subr.mxu0 0.0
    %273 = vmatpush1.msra.mxu0 0.0
    %274 = vmatprep.subr.mxu0 0.0
    %275 = vmatpush1.msra.mxu0 0.0
    %276 = vmatprep.subr.mxu0 0.0
    %277 = vmatpush1.msra.mxu0 0.0
    %278 = vmatprep.subr.mxu0 0.0
    %279 = vmatpush1.msra.mxu0 0.0
    %280 = vmatprep.subr.mxu0 0.0
    %281 = vmatpush1.msra.mxu0 0.0
    %282 = vmatprep.subr.mxu0 0.0
    %283 = vmatpush1.msra.mxu0 0.0
    %284 = vmatprep.subr.mxu0 0.0
    %285 = vmatpush1.msra.mxu0 0.0
    %286 = vmatprep.subr.mxu0 0.0
    %287 = vmatpush1.msra.mxu0 0.0
    %288 = vmatprep.subr.mxu0 0.0
    %289 = vmatpush1.msra.mxu0 0.0
    %290 = vmatprep.subr.mxu0 0.0
    %291 = vmatpush1.msra.mxu0 0.0
    %292 = vmatprep.subr.mxu0 0.0
    %293 = vmatpush1.msra.mxu0 0.0
    %294 = vmatprep.subr.mxu0 0.0
    %295 = vmatpush1.msra.mxu0 0.0
    %296 = vmatprep.mubr.f32.mxu0 0.0
    %297 = vmatmul.mubr.f32.gmra.mrb[0].mxu0 %v226
    %v298 = vpop.f32.mrb[0].mxu0
    %v299 = vadd.f32 %v221, %v298
    %v300 = vpop.f32.mrb[0].mxu0
    %301 = vdwg.mxu0
    %s302 = smul.u32 0, 8
    %v303 = vlaneseq
    %v304 = vshrl.u32 %v303, 7
    %v305 = vstv %s302
    %v306 = vadd.s32 %v305, %v304
    %v307 = vlaneseq
    %v308 = vand.u32 %v307, 127
    %vm309 = vcmp.lt.s32.totalorder %v306, 0
    %v310 = vsub.s32 0, %v306
    %v311 = vsel %vm309, %v310, %v306
    %v312 = vshrl.u32 %v311, 2
    %v313 = vand.u32 %v311, 3
    %v314 = vsub.s32 0, %v313
    %v315 = vsel %vm309, %v314, %v313
    %vm316 = vcmp.ne.s32.totalorder %v315, 0
    %vm317 = vcmp.lt.s32.totalorder %v315, 0
    %vm318 = vmand %vm317, %vm316
    %v319 = vadd.s32 %v315, 4
    %v320 = vsel %vm318, %v319, %v315
    %vm321 = vcmp.eq.s32.totalorder %v320, %v308
    %v322 = vsel %vm321, 1, 0
    %v323 = vcvt.s32.f32 %v322
    %v324 = vld [vmem:[%s5] sm:$0xf]
    %vm325 = vcmask 31744
    %v327 = vsel %vm325, %v323, 0
    %vm329 = vcmask 1043456
    %v331 = vsel %vm329, %v324, 0
    %333 = vmatprep.subr.mxu0 0.0
    %334 = vmatpush1.msra.mxu0 %v331
    %335 = vmatprep.subr.mxu0 0.0
    %336 = vmatpush1.msra.mxu0 0.0
    %337 = vmatprep.subr.mxu0 0.0
    %338 = vmatpush1.msra.mxu0 0.0
    %339 = vmatprep.subr.mxu0 0.0
    %340 = vmatpush1.msra.mxu0 0.0
    %341 = vmatprep.subr.mxu0 0.0
    %342 = vmatpush1.msra.mxu0 0.0
    %343 = vmatprep.subr.mxu0 0.0
    %344 = vmatpush1.msra.mxu0 0.0
    %345 = vmatprep.subr.mxu0 0.0
    %346 = vmatpush1.msra.mxu0 0.0
    %347 = vmatprep.subr.mxu0 0.0
    %348 = vmatpush1.msra.mxu0 0.0
    %349 = vmatprep.subr.mxu0 0.0
    %350 = vmatpush1.msra.mxu0 0.0
    %351 = vmatprep.subr.mxu0 0.0
    %352 = vmatpush1.msra.mxu0 0.0
    %353 = vmatprep.subr.mxu0 0.0
    %354 = vmatpush1.msra.mxu0 0.0
    %355 = vmatprep.subr.mxu0 0.0
    %356 = vmatpush1.msra.mxu0 0.0
    %357 = vmatprep.subr.mxu0 0.0
    %358 = vmatpush1.msra.mxu0 0.0
    %359 = vmatprep.subr.mxu0 0.0
    %360 = vmatpush1.msra.mxu0 0.0
    %361 = vmatprep.subr.mxu0 0.0
    %362 = vmatpush1.msra.mxu0 0.0
    %363 = vmatprep.subr.mxu0 0.0
    %364 = vmatpush1.msra.mxu0 0.0
    %365 = vmatprep.subr.mxu0 0.0
    %366 = vmatpush1.msra.mxu0 0.0
    %367 = vmatprep.subr.mxu0 0.0
    %368 = vmatpush1.msra.mxu0 0.0
    %369 = vmatprep.subr.mxu0 0.0
    %370 = vmatpush1.msra.mxu0 0.0
    %371 = vmatprep.subr.mxu0 0.0
    %372 = vmatpush1.msra.mxu0 0.0
    %373 = vmatprep.subr.mxu0 0.0
    %374 = vmatpush1.msra.mxu0 0.0
    %375 = vmatprep.subr.mxu0 0.0
    %376 = vmatpush1.msra.mxu0 0.0
    %377 = vmatprep.subr.mxu0 0.0
    %378 = vmatpush1.msra.mxu0 0.0
    %379 = vmatprep.subr.mxu0 0.0
    %380 = vmatpush1.msra.mxu0 0.0
    %381 = vmatprep.subr.mxu0 0.0
    %382 = vmatpush1.msra.mxu0 0.0
    %383 = vmatprep.subr.mxu0 0.0
    %384 = vmatpush1.msra.mxu0 0.0
    %385 = vmatprep.subr.mxu0 0.0
    %386 = vmatpush1.msra.mxu0 0.0
    %387 = vmatprep.subr.mxu0 0.0
    %388 = vmatpush1.msra.mxu0 0.0
    %389 = vmatprep.subr.mxu0 0.0
    %390 = vmatpush1.msra.mxu0 0.0
    %391 = vmatprep.subr.mxu0 0.0
    %392 = vmatpush1.msra.mxu0 0.0
    %393 = vmatprep.subr.mxu0 0.0
    %394 = vmatpush1.msra.mxu0 0.0
    %395 = vmatprep.subr.mxu0 0.0
    %396 = vmatpush1.msra.mxu0 0.0
    %397 = vmatprep.mubr.f32.mxu0 0.0
    %398 = vmatmul.mubr.f32.gmra.mrb[0].mxu0 %v327
    %v399 = vpop.f32.mrb[0].mxu0
    %v400 = vadd.f32 0.0, %v399
    %v401 = vpop.f32.mrb[0].mxu0
    %402 = vdwg.mxu0
    %v403 = vadd.f32 %v299, %v400
    %v404 = vld [vmem:[%s6] sm:$0x1]
    %v406 = vlaneseq
    %v407 = vshrl.u32 %v406, 7
    %v408 = vsub.s32 0, %v407
    %v409 = vrot.slane %v404, %v408
    %v411 = vadd.f32 %v403, %v409
    %v412 = vmax.f32 %v411, 0.0
    %v413 = vld [vmem:[#allocation8] sm:$0xff]
    %v414 = vld [vmem:[#allocation12] sm:$0xff]
    %v415 = vld [vmem:[#allocation12 + $0x8] sm:$0xff]
    %v416 = vld [vmem:[#allocation12 + $0x10] sm:$0xff]
    %v417 = vld [vmem:[#allocation12 + $0x18] sm:$0xff]
    %v418 = vld [vmem:[#allocation14] sm:$0x1]
    %v420 = vlaneseq
    %v421 = vshrl.u32 %v420, 7
    %v422 = vsub.s32 0, %v421
    %v423 = vrot.slane %v418, %v422
    %vm425 = vcmask 261120
    %v427 = vsel %vm425, %v412, 0
    %429 = vmatprep.subr.mxu0 0.0
    %430 = vmatpush1.msra.mxu0 %v414
    %431 = vmatprep.subr.mxu0 0.0
    %432 = vmatpush1.msra.mxu0 %v415
    %433 = vmatprep.subr.mxu0 0.0
    %434 = vmatpush1.msra.mxu0 %v416
    %435 = vmatprep.subr.mxu0 0.0
    %436 = vmatpush1.msra.mxu0 %v417
    %437 = vmatprep.subr.mxu0 0.0
    %438 = vmatpush1.msra.mxu0 0.0
    %439 = vmatprep.subr.mxu0 0.0
    %440 = vmatpush1.msra.mxu0 0.0
    %441 = vmatprep.subr.mxu0 0.0
    %442 = vmatpush1.msra.mxu0 0.0
    %443 = vmatprep.subr.mxu0 0.0
    %444 = vmatpush1.msra.mxu0 0.0
    %445 = vmatprep.subr.mxu0 0.0
    %446 = vmatpush1.msra.mxu0 0.0
    %447 = vmatprep.subr.mxu0 0.0
    %448 = vmatpush1.msra.mxu0 0.0
    %449 = vmatprep.subr.mxu0 0.0
    %450 = vmatpush1.msra.mxu0 0.0
    %451 = vmatprep.subr.mxu0 0.0
    %452 = vmatpush1.msra.mxu0 0.0
    %453 = vmatprep.subr.mxu0 0.0
    %454 = vmatpush1.msra.mxu0 0.0
    %455 = vmatprep.subr.mxu0 0.0
    %456 = vmatpush1.msra.mxu0 0.0
    %457 = vmatprep.subr.mxu0 0.0
    %458 = vmatpush1.msra.mxu0 0.0
    %459 = vmatprep.subr.mxu0 0.0
    %460 = vmatpush1.msra.mxu0 0.0
    %461 = vmatprep.subr.mxu0 0.0
    %462 = vmatpush1.msra.mxu0 0.0
    %463 = vmatprep.subr.mxu0 0.0
    %464 = vmatpush1.msra.mxu0 0.0
    %465 = vmatprep.subr.mxu0 0.0
    %466 = vmatpush1.msra.mxu0 0.0
    %467 = vmatprep.subr.mxu0 0.0
    %468 = vmatpush1.msra.mxu0 0.0
    %469 = vmatprep.subr.mxu0 0.0
    %470 = vmatpush1.msra.mxu0 0.0
    %471 = vmatprep.subr.mxu0 0.0
    %472 = vmatpush1.msra.mxu0 0.0
    %473 = vmatprep.subr.mxu0 0.0
    %474 = vmatpush1.msra.mxu0 0.0
    %475 = vmatprep.subr.mxu0 0.0
    %476 = vmatpush1.msra.mxu0 0.0
    %477 = vmatprep.subr.mxu0 0.0
    %478 = vmatpush1.msra.mxu0 0.0
    %479 = vmatprep.subr.mxu0 0.0
    %480 = vmatpush1.msra.mxu0 0.0
    %481 = vmatprep.subr.mxu0 0.0
    %482 = vmatpush1.msra.mxu0 0.0
    %483 = vmatprep.subr.mxu0 0.0
    %484 = vmatpush1.msra.mxu0 0.0
    %485 = vmatprep.subr.mxu0 0.0
    %486 = vmatpush1.msra.mxu0 0.0
    %487 = vmatprep.subr.mxu0 0.0
    %488 = vmatpush1.msra.mxu0 0.0
    %489 = vmatprep.subr.mxu0 0.0
    %490 = vmatpush1.msra.mxu0 0.0
    %491 = vmatprep.subr.mxu0 0.0
    %492 = vmatpush1.msra.mxu0 0.0
    %493 = vmatprep.mubr.f32.mxu0 0.0
    %494 = vmatmul.mubr.f32.gmra.mrb[0].mxu0 %v427
    %v495 = vpop.f32.mrb[0].mxu0
    %v496 = vadd.f32 %v423, %v495
    %v497 = vpop.f32.mrb[0].mxu0
    %498 = vdwg.mxu0
    %v499 = vld [vmem:[%s9] sm:$0xff]
    %v500 = vld [vmem:[%s9 + $0x8] sm:$0xff]
    %v501 = vld [vmem:[%s9 + $0x10] sm:$0xff]
    %v502 = vld [vmem:[%s9 + $0x18] sm:$0xff]
    %v503 = vld [vmem:[%s10] sm:$0x1]
    %v505 = vlaneseq
    %v506 = vshrl.u32 %v505, 7
    %v507 = vsub.s32 0, %v506
    %v508 = vrot.slane %v503, %v507
    %v511 = vsel %vm425, %v413, 0
    %513 = vmatprep.subr.mxu0 0.0
    %514 = vmatpush1.msra.mxu0 %v499
    %515 = vmatprep.subr.mxu0 0.0
    %516 = vmatpush1.msra.mxu0 %v500
    %517 = vmatprep.subr.mxu0 0.0
    %518 = vmatpush1.msra.mxu0 %v501
    %519 = vmatprep.subr.mxu0 0.0
    %520 = vmatpush1.msra.mxu0 %v502
    %521 = vmatprep.subr.mxu0 0.0
    %522 = vmatpush1.msra.mxu0 0.0
    %523 = vmatprep.subr.mxu0 0.0
    %524 = vmatpush1.msra.mxu0 0.0
    %525 = vmatprep.subr.mxu0 0.0
    %526 = vmatpush1.msra.mxu0 0.0
    %527 = vmatprep.subr.mxu0 0.0
    %528 = vmatpush1.msra.mxu0 0.0
    %529 = vmatprep.subr.mxu0 0.0
    %530 = vmatpush1.msra.mxu0 0.0
    %531 = vmatprep.subr.mxu0 0.0
    %532 = vmatpush1.msra.mxu0 0.0
    %533 = vmatprep.subr.mxu0 0.0
    %534 = vmatpush1.msra.mxu0 0.0
    %535 = vmatprep.subr.mxu0 0.0
    %536 = vmatpush1.msra.mxu0 0.0
    %537 = vmatprep.subr.mxu0 0.0
    %538 = vmatpush1.msra.mxu0 0.0
    %539 = vmatprep.subr.mxu0 0.0
    %540 = vmatpush1.msra.mxu0 0.0
    %541 = vmatprep.subr.mxu0 0.0
    %542 = vmatpush1.msra.mxu0 0.0
    %543 = vmatprep.subr.mxu0 0.0
    %544 = vmatpush1.msra.mxu0 0.0
    %545 = vmatprep.subr.mxu0 0.0
    %546 = vmatpush1.msra.mxu0 0.0
    %547 = vmatprep.subr.mxu0 0.0
    %548 = vmatpush1.msra.mxu0 0.0
    %549 = vmatprep.subr.mxu0 0.0
    %550 = vmatpush1.msra.mxu0 0.0
    %551 = vmatprep.subr.mxu0 0.0
    %552 = vmatpush1.msra.mxu0 0.0
    %553 = vmatprep.subr.mxu0 0.0
    %554 = vmatpush1.msra.mxu0 0.0
    %555 = vmatprep.subr.mxu0 0.0
    %556 = vmatpush1.msra.mxu0 0.0
    %557 = vmatprep.subr.mxu0 0.0
    %558 = vmatpush1.msra.mxu0 0.0
    %559 = vmatprep.subr.mxu0 0.0
    %560 = vmatpush1.msra.mxu0 0.0
    %561 = vmatprep.subr.mxu0 0.0
    %562 = vmatpush1.msra.mxu0 0.0
    %563 = vmatprep.subr.mxu0 0.0
    %564 = vmatpush1.msra.mxu0 0.0
    %565 = vmatprep.subr.mxu0 0.0
    %566 = vmatpush1.msra.mxu0 0.0
    %567 = vmatprep.subr.mxu0 0.0
    %568 = vmatpush1.msra.mxu0 0.0
    %569 = vmatprep.subr.mxu0 0.0
    %570 = vmatpush1.msra.mxu0 0.0
    %571 = vmatprep.subr.mxu0 0.0
    %572 = vmatpush1.msra.mxu0 0.0
    %573 = vmatprep.subr.mxu0 0.0
    %574 = vmatpush1.msra.mxu0 0.0
    %575 = vmatprep.subr.mxu0 0.0
    %576 = vmatpush1.msra.mxu0 0.0
    %577 = vmatprep.mubr.f32.mxu0 0.0
    %578 = vmatmul.mubr.f32.gmra.mrb[0].mxu0 %v511
    %v579 = vpop.f32.mrb[0].mxu0
    %v580 = vadd.f32 %v508, %v579
    %v581 = vpop.f32.mrb[0].mxu0
    %582 = vdwg.mxu0
    %v583 = vadd.f32 %v496, %v580
    %v584 = vxor.u32 %v583, 2147483648
    %v585 = vmul.f32 %v584, 1.442695
    %v586 = vpow.pop %v585
    %v587 = vadd.f32 %v586, 1.0
    %v588 = vrcp.pop %v587
    %v589 = vmul.f32 1.0, %v588
    %591 = vrot.lane.b32.xlu0 %v580, 64
    %v592 = vpop.permute.xlu0 %591
    %v594 = vmul.f32 %v589, %v592
    %596 = vrot.lane.b32.xlu0 %v594, 64
    %v597 = vpop.permute.xlu0 %596
    %v599 = vadd.f32 %v496, %v597
    %v600 = vtanh.pop %v599
    %v601 = vsub.f32 1.0, %v589
    %603 = vrot.lane.b32.xlu0 %v600, 96
    %v604 = vpop.permute.xlu0 %603
    %v606 = vmul.f32 %v601, %v604
    %607 = vrot.lane.b32.xlu0 %v413, 32
    %v608 = vpop.permute.xlu0 %607
    %v610 = vmul.f32 %v589, %v608
    %v611 = vadd.f32 %v606, %v610
    %613 = vrot.lane.b32.xlu0 %v611, 96
    %v614 = vpop.permute.xlu0 %613
    %616 = vst.msk [vmem:[#allocation16] sm:$0xff] %vm425, %v614
    %v617 = vsel %vm425, %v614, 0.0
    %618 = vadd.xlane.f32.xlu0 %v617
    %v619 = vpop.xlane.xlu0 %618
    %v620 = vrcp.pop 32.0
    %v621 = vmul.f32 %v619, %v620
    %v622 = vsub.f32 %v611, %v621
    %v623 = vmul.f32 %v622, %v622
    %625 = vrot.lane.b32.xlu0 %v623, 96
    %v626 = vpop.permute.xlu0 %625
    %v628 = vsel %vm425, %v626, 0.0
    %629 = vadd.xlane.f32.xlu0 %v628
    %v630 = vpop.xlane.xlu0 %629
    %v631 = vmul.f32 %v630, %v620
    %v632 = vadd.f32 %v631, 1e-05
    %v633 = vrsqrt.pop %v632
    %v634 = vmul.f32 %v622, %v633
    %v635 = vld [vmem:[%s11] sm:$0x1]
    %v637 = vlaneseq
    %v638 = vshrl.u32 %v637, 7
    %v639 = vsub.s32 0, %v638
    %v640 = vrot.slane %v635, %v639
    %641 = vrot.lane.b32.xlu0 %v640, 32
    %v642 = vpop.permute.xlu0 %641
    %v644 = vmul.f32 %v634, %v642
    %v645 = vld [vmem:[%s12] sm:$0x1]
    %v647 = vlaneseq
    %v648 = vshrl.u32 %v647, 7
    %v649 = vsub.s32 0, %v648
    %v650 = vrot.slane %v645, %v649
    %651 = vrot.lane.b32.xlu0 %v650, 32
    %v652 = vpop.permute.xlu0 %651
    %v654 = vadd.f32 %v644, %v652
    %v655 = vld [vmem:[%s13] sm:$0x1]
    %v657 = vlaneseq
    %v658 = vshrl.u32 %v657, 7
    %v659 = vsub.s32 0, %v658
    %v660 = vrot.slane %v655, %v659
    %661 = vrot.lane.b32.xlu0 %v660, 32
    %v662 = vpop.permute.xlu0 %661
    %v664 = vmul.f32 %v654, %v662
    %666 = vrot.lane.b32.xlu0 %v664, 96
    %v667 = vpop.permute.xlu0 %666
    %v669 = vsel %vm425, %v667, 0.0
    %670 = vadd.xlane.f32.xlu0 %v669
    %v671 = vpop.xlane.xlu0 %670
    %v672 = vld [vmem:[#allocation2] sm:$0x1]
    %v674 = vlaneseq
    %v675 = vshrl.u32 %v674, 7
    %v676 = vsub.s32 0, %v675
    %v677 = vrot.slane %v672, %v676
    %v679 = vadd.f32 %v671, %v677
    %681 = vset.pattern.permute.xlu0 0
    %682 = vperm.xlu0 %681, %v679
    %v683 = vpop.permute.xlu0 %682
    %685 = vst [vmem:[#allocation15] sm:$0xff] %v683
    // Predicated region
    $region90: #{tpu_custom_call.1} parent=1 // pred_check
      _
    $region91: #{tpu_custom_call.1} parent=1 // pred_check_branch
      %687 = sbr.rel (0) target = $region93
    $region92: #{tpu_custom_call.1} parent=1 // pred_region
      %s689 = ssub.s32 128, 128
      %690 = vsyncadd [#allocation5], %s689
      %s692 = sshll.u32 [#allocation15], 4
      %s693 = int_to_ptr.vmem [resolvable:$true] %s692
      %695 = dma.vmem_to_hbm [thread:$0]  %s693, 128, %s15, [#allocation5]
    $region93: #{tpu_custom_call.1} parent=1 // pred_fallthru
      _
    // Predicated region
    $region94: #{tpu_custom_call.1} parent=1 // pred_check
      _
    $region95: #{tpu_custom_call.1} parent=1 // pred_check_branch
      %697 = sbr.rel (0) target = $region97
    $region96: #{tpu_custom_call.1} parent=1 // pred_region
      %s699 = ssub.s32 128, 128
      %700 = vsyncadd [#allocation17], %s699
      %s702 = sshll.u32 [#allocation16], 4
      %s703 = int_to_ptr.vmem [resolvable:$true] %s702
      %705 = dma.vmem_to_hbm [thread:$0]  %s703, 128, %s16, [#allocation17]
    $region97: #{tpu_custom_call.1} parent=1 // pred_fallthru
      _
    // Predicated region
    $region98: #{tpu_custom_call.1} parent=1 // pred_check
      _
    $region99: #{tpu_custom_call.1} parent=1 // pred_check_branch
      %707 = sbr.rel (0) target = $region101
    $region100: #{tpu_custom_call.1} parent=1 // pred_region
      %708 = dma.done [#allocation5], 128
    $region101: #{tpu_custom_call.1} parent=1 // pred_fallthru
      _
    // Predicated region
    $region102: #{tpu_custom_call.1} parent=1 // pred_check
      _
    $region103: #{tpu_custom_call.1} parent=1 // pred_check_branch
      %710 = sbr.rel (0) target = $region105
    $region104: #{tpu_custom_call.1} parent=1 // pred_region
      %711 = dma.done [#allocation17], 128
    $region105: #{tpu_custom_call.1} parent=1 // pred_fallthru
      _
    %712 = vsyncpa [#allocation4], 1
    %713 = vsyncpa [#allocation7], 1
    %714 = vsyncpa [#allocation10], 1
    %715 = vsyncpa [#allocation13], 1
    %716 = vsyncpa [#allocation5], 1
    %717 = vsyncpa [#allocation17], 1

</llo_original>
